<compile_context>
chip_gen: v7x
topology: tpu7x:2x2x1
jax: 0.10.0
libtpu: 0.0.40
codegen_flags: <defaults>
</compile_context>

<pallas_src>
import functools

import jax
import jax.numpy as jnp
from jax import lax
from jax.experimental import pallas as pl
from jax.experimental.pallas import tpu as pltpu

LN_EPS = 1e-5


def _round_up(x, m):
    return (x + m - 1) // m * m


def _usable_vmem_bytes():
    """Generation-aware usable-VMEM budget (leaves Mosaic-scratch headroom)."""
    cap = 128 << 20
    try:
        info = pltpu.get_tpu_info()
        cap = int(getattr(info, "vmem_capacity_bytes", cap))
    except Exception:
        pass
    # v7x: 64 MiB physical -> ~56 MiB usable; v5e/v6e: 128 MiB -> ~110 MiB.
    return max(min(cap - (8 << 20), 110 << 20), 32 << 20)


def _vmem_footprint(tm, dp, hp, hn):
    """Approximate per-step VMEM residency (bytes) for the chosen tiling."""
    nh = hp // hn
    wbuf = 1 if nh == 1 else 2            # constants single-buffered when nh == 1
    row_tiles = (2 + 2 + 2) * tm * dp * 4          # inp, x, out (double-buffered f32)
    weights = wbuf * 2 * dp * hn * 2               # W1 + W2 blocks (bf16)
    params = wbuf * 8 * hn * 4 + 8 * dp * 4        # b1 block (sublane-padded) + packed LN
    scratch = 2 * tm * dp * 4                      # h, acc scratch (f32)
    inter = tm * hn * 4 + tm * hn * 2 + tm * dp * 2  # z (f32) + bf16 copies of z, h
    return row_tiles + weights + params + scratch + inter


def _skipcon_kernel(inp_ref, x_ref, w1_ref, b1_ref, w2_ref, ln_ref, out_ref,
                    h_sc, acc_sc, *, true_d):
    inv_d = 1.0 / float(true_d)

    def layer_norm(v, g, b):
        # One-pass mean/variance.  Padded lanes of v are exactly zero (inputs,
        # weights, biases and gammas are zero-padded), so lane sums over Dp
        # equal sums over the true D lanes, and the output's padded lanes come
        # out as (0 - mu) * rsqrt(var + eps) * 0 + 0 == 0.
        s = jnp.sum(v, axis=-1, keepdims=True)
        sq = jnp.sum(v * v, axis=-1, keepdims=True)
        mu = s * inv_d
        var = jnp.maximum(sq * inv_d - mu * mu, 0.0)
        return (v - mu) * lax.rsqrt(var + LN_EPS) * g + b

    hb = pl.program_id(1)

    # First hidden block for this row tile: residual add + LayerNorm1
    # (dropout = identity in eval mode), stash h, zero the FFN accumulator.
    @pl.when(hb == 0)
    def _():
        h_sc[...] = layer_norm(x_ref[...] + inp_ref[...],
                               ln_ref[1:2, :], ln_ref[2:3, :])   # g1, beta1
        acc_sc[...] = jnp.zeros_like(acc_sc)

    # FFN partial: D -> Hn (ReLU) -> D; bf16 MXU inputs, f32 accumulation.
    h = h_sc[...]
    z = jnp.dot(h.astype(jnp.bfloat16), w1_ref[...],
                preferred_element_type=jnp.float32) + b1_ref[...]
    z = jnp.maximum(z, 0.0)                                      # ReLU
    acc_sc[...] += jnp.dot(z.astype(jnp.bfloat16), w2_ref[...],
                           preferred_element_type=jnp.float32)

    # Last hidden block: output bias, residual add + LayerNorm2, store.
    @pl.when(hb == pl.num_programs(1) - 1)
    def _():
        ff = acc_sc[...] + ln_ref[0:1, :]                        # b2
        out_ref[...] = layer_norm(h_sc[...] + ff,
                                  ln_ref[3:4, :], ln_ref[4:5, :]  # g2, beta2
                                  ).astype(out_ref.dtype)


def skipcon_forward(inp, x, params, *, tile_rows=None, hidden_block=None,
                    out_dtype=jnp.float32):
    """inp, x: [B, S, D]  ->  [B, S, D]."""
    B, S, D = x.shape
    w1, b1, w2, b2, g1, beta1, g2, beta2 = params
    H = w1.shape[1]                         # 4 * D

    rows = B * S
    rows8 = _round_up(rows, 8)              # sublane-align rows only (never to tm)
    Dp = _round_up(D, 128)                  # lane-dense feature dim
    Hp = _round_up(H, 128)                  # lane-dense hidden dim

    f32, bf16 = jnp.float32, jnp.bfloat16
    usable = _usable_vmem_bytes()

    # ---- row tile: big (512 on 128-MiB-VMEM parts, 256 on v7x) but always
    # giving >= 2 grid steps when rows allow, so both v7x TensorCores work.
    if tile_rows is None:
        tile_rows = 512 if usable >= (96 << 20) else 256
    tm = _round_up(min(tile_rows, rows8), 8)
    if rows8 > 8 and pl.cdiv(rows8, tm) < 2:
        tm = _round_up(pl.cdiv(rows8, 2), 8)
    # shrink tm until even the smallest hidden block fits the VMEM budget
    while tm > 8 and _vmem_footprint(tm, Dp, Hp, 128) > usable:
        tm = max(8, _round_up(tm // 2, 8))

    # ---- hidden-dim tile: whole Hp when it fits (constant operands become
    # single-buffered whole-array VMEM refs); otherwise the largest 128-multiple
    # divisor of Hp whose per-step footprint fits (bounds resident weight bytes).
    if hidden_block is not None:
        assert hidden_block % 128 == 0 and Hp % hidden_block == 0
        Hn = hidden_block
    else:
        Hn = 128
        for cand in range(Hp, 127, -128):
            if Hp % cand == 0 and _vmem_footprint(tm, Dp, Hp, cand) <= usable:
                Hn = cand
                break
    nh = Hp // Hn

    # ---- zero-padded, lane-dense operands (padding must remain zero!) ----
    def prep_rows(a):
        a = a if a.dtype == f32 else a.astype(f32)
        a = a.reshape(rows, D)
        if rows8 != rows or Dp != D:
            a = jnp.pad(a, ((0, rows8 - rows), (0, Dp - D)))
        return a

    def pad2(a, pr, pc):
        return jnp.pad(a, ((0, pr), (0, pc))) if (pr or pc) else a

    inp2 = prep_rows(inp)
    x2 = prep_rows(x)
    w1p = pad2(w1.astype(bf16), Dp - D, Hp - H)
    w2p = pad2(w2.astype(bf16), Hp - H, Dp - D)
    b1p = pad2(b1.astype(f32).reshape(1, H), 0, Hp - H)
    # pack the five (D,) vectors into one (8, Dp) operand:
    #   row 0: b2, 1: g1, 2: beta1, 3: g2, 4: beta2, rows 5-7: zero padding.
    ln_pack = pad2(jnp.stack([b2, g1, beta1, g2, beta2], axis=0).astype(f32),
                   3, Dp - D)

    grid = (pl.cdiv(rows8, tm), nh)         # reduction (hidden) axis last
    row_spec = pl.BlockSpec((tm, Dp), lambda i, hb: (i, 0))
    vmem_whole = pl.BlockSpec(memory_space=pltpu.MemorySpace.VMEM)

    if nh == 1:
        # Constant across the whole grid -> whole-array, single-copy VMEM refs
        # (no second pipeline buffer wasted on never-changing blocks).
        w1_spec = b1_spec = w2_spec = vmem_whole
    else:
        w1_spec = pl.BlockSpec((Dp, Hn), lambda i, hb: (0, hb))
        b1_spec = pl.BlockSpec((1, Hn), lambda i, hb: (0, hb))
        w2_spec = pl.BlockSpec((Hn, Dp), lambda i, hb: (hb, 0))
    ln_spec = vmem_whole                     # always constant

    fp = _vmem_footprint(tm, Dp, Hp, Hn)
    vmem_limit = int(min(max(int(fp * 1.25) + (2 << 20), 32 << 20), usable))

    kernel = functools.partial(_skipcon_kernel, true_d=D)

    out = pl.pallas_call(
        kernel,
        out_shape=jax.ShapeDtypeStruct((rows8, Dp), out_dtype),
        grid_spec=pltpu.PrefetchScalarGridSpec(
            num_scalar_prefetch=0,
            grid=grid,
            in_specs=[row_spec,   # input (dropout operand)
                      row_spec,   # x (residual)
                      w1_spec,    # W1 (bf16)
                      b1_spec,    # b1
                      w2_spec,    # W2 (bf16)
                      ln_spec],   # packed [b2, g1, beta1, g2, beta2]
            out_specs=row_spec,
            scratch_shapes=[pltpu.VMEM((tm, Dp), f32),    # h = LN1(x + input)
                            pltpu.VMEM((tm, Dp), f32)],   # FFN f32 accumulator
        ),
        compiler_params=pltpu.CompilerParams(
            dimension_semantics=("parallel", "arbitrary"),
            vmem_limit_bytes=vmem_limit,
        ),
    )(inp2, x2, w1p, b1p, w2p, ln_pack)

    if rows8 != rows or Dp != D:
        out = out[:rows, :D]
    return out.reshape(B, S, D)


def init_params(model_dim, key):
    """Deterministic init.  W stored as (in, out), bf16 (so the kernel does
    x @ W + b, equivalent to PyTorch's x @ weight.T + bias)."""
    D, H = model_dim, 4 * model_dim
    k1, k2 = jax.random.split(key)
    bound1 = 1.0 / (D ** 0.5)
    bound2 = 1.0 / (H ** 0.5)
    w1 = jax.random.uniform(k1, (D, H), jnp.float32, -bound1, bound1).astype(jnp.bfloat16)
    w2 = jax.random.uniform(k2, (H, D), jnp.float32, -bound2, bound2).astype(jnp.bfloat16)
    b1 = jnp.zeros((H,), jnp.float32)
    b2 = jnp.zeros((D,), jnp.float32)
    g1 = jnp.ones((D,), jnp.float32)
    beta1 = jnp.zeros((D,), jnp.float32)
    g2 = jnp.ones((D,), jnp.float32)
    beta2 = jnp.zeros((D,), jnp.float32)
    return (w1, b1, w2, b2, g1, beta1, g2, beta2)


def skipcon_ref(inp, x, params):
    """Pure-JAX f32 reference (eval-mode dropout = identity)."""
    w1, b1, w2, b2, g1, beta1, g2, beta2 = params
    w1 = w1.astype(jnp.float32)
    w2 = w2.astype(jnp.float32)

    def ln(v, g, b):
        mu = jnp.mean(v, axis=-1, keepdims=True)
        var = jnp.mean((v - mu) ** 2, axis=-1, keepdims=True)
        return (v - mu) * jax.lax.rsqrt(var + LN_EPS) * g + b

    h = ln(x + inp, g1, beta1)
    ff = jnp.maximum(h @ w1 + b1, 0.0) @ w2 + b2
    return ln(h + ff, g2, beta2)


if __name__ == "__main__":
    key = jax.random.PRNGKey(0)
    k_inp, k_x, k_p, k2_inp, k2_x, k2_p = jax.random.split(key, 6)

    # --- test 1: whole hidden dim resident (nh == 1, single-buffered consts) ---
    B, S, D = 2, 8, 32
    inp = jax.random.normal(k_inp, (B, S, D), jnp.float32)
    x = jax.random.normal(k_x, (B, S, D), jnp.float32)
    params = init_params(D, k_p)
    out = jax.block_until_ready(skipcon_forward(inp, x, params))
    ref = skipcon_ref(inp, x, params)
    err1 = float(jnp.max(jnp.abs(out - ref)))
    # bf16 matmul inputs -> loosen tolerance vs the pure-f32 reference.
    assert jnp.allclose(out, ref, atol=5e-2, rtol=5e-2), (
        f"nh==1 path mismatch vs reference (max abs err {err1})")

    # --- test 2: force the hidden-dim-tiled accumulator path (nh > 1) ---
    D2 = 64                                     # Hp = 256 -> two 128-wide blocks
    inp2 = jax.random.normal(k2_inp, (B, S, D2), jnp.float32)
    x2 = jax.random.normal(k2_x, (B, S, D2), jnp.float32)
    params2 = init_params(D2, k2_p)
    out2 = jax.block_until_ready(
        skipcon_forward(inp2, x2, params2, hidden_block=128))
    ref2 = skipcon_ref(inp2, x2, params2)
    err2 = float(jnp.max(jnp.abs(out2 - ref2)))
    assert jnp.allclose(out2, ref2, atol=5e-2, rtol=5e-2), (
        f"nh>1 path mismatch vs reference (max abs err {err2})")

    # TODO(synk): training-mode dropout (stochastic masking via pltpu.prng_*)
    # is intentionally not implemented; forward matches eval-mode semantics.
    print("KERNEL_OK")
</pallas_src>

<mosaic_0001>
module attributes {stable_mosaic.version = 11 : i64} {
  func.func @_skipcon_kernel(%arg0: i32, %arg1: i32, %arg2: memref<8x128xf32, #tpu.memory_space<vmem>>, %arg3: memref<8x128xf32, #tpu.memory_space<vmem>>, %arg4: memref<128x128xbf16, #tpu.memory_space<vmem>>, %arg5: memref<1x128xf32, #tpu.memory_space<vmem>>, %arg6: memref<128x128xbf16, #tpu.memory_space<vmem>>, %arg7: memref<8x128xf32, #tpu.memory_space<vmem>>, %arg8: memref<8x128xf32, #tpu.memory_space<vmem>>, %arg9: memref<8x128xf32, #tpu.memory_space<vmem>>, %arg10: memref<8x128xf32, #tpu.memory_space<vmem>>) attributes {dimension_semantics = [#tpu.dimension_semantics<parallel>, #tpu.dimension_semantics<arbitrary>], iteration_bounds = array<i64: 2, 1>, scalar_prefetch = 0 : i64, scratch_operands = 2 : i64, tpu.core_type = #tpu.core_type<tc>, window_params = [{transform_indices = @transform_0, window_bounds = array<i64: 8, 128>}, {transform_indices = @transform_1, window_bounds = array<i64: 8, 128>}, {pipeline_mode = #tpu.pipeline_mode<synchronous>, transform_indices = @transform_2, window_bounds = array<i64: 128, 128>}, {pipeline_mode = #tpu.pipeline_mode<synchronous>, transform_indices = @transform_3, window_bounds = array<i64: 1, 128>}, {pipeline_mode = #tpu.pipeline_mode<synchronous>, transform_indices = @transform_4, window_bounds = array<i64: 128, 128>}, {pipeline_mode = #tpu.pipeline_mode<synchronous>, transform_indices = @transform_5, window_bounds = array<i64: 8, 128>}, {transform_indices = @transform_6, window_bounds = array<i64: 8, 128>}]} {
    %c0_i32 = arith.constant 0 : i32
    %0 = arith.cmpi eq, %arg1, %c0_i32 : i32
    %1 = arith.extui %0 : i1 to i32
    %c0_i32_0 = arith.constant 0 : i32
    %2 = arith.cmpi ne, %1, %c0_i32_0 : i32
    scf.if %2 {
      %c0_16 = arith.constant 0 : index
      %c0_17 = arith.constant 0 : index
      %21 = vector.load %arg3[%c0_16, %c0_17] : memref<8x128xf32, #tpu.memory_space<vmem>>, vector<8x128xf32>
      %c0_18 = arith.constant 0 : index
      %c0_19 = arith.constant 0 : index
      %22 = vector.load %arg2[%c0_18, %c0_19] : memref<8x128xf32, #tpu.memory_space<vmem>>, vector<8x128xf32>
      %23 = arith.addf %21, %22 : vector<8x128xf32>
      %c1 = arith.constant 1 : index
      %c0_20 = arith.constant 0 : index
      %24 = vector.load %arg7[%c1, %c0_20] : memref<8x128xf32, #tpu.memory_space<vmem>>, vector<1x128xf32>
      %c2 = arith.constant 2 : index
      %c0_21 = arith.constant 0 : index
      %25 = vector.load %arg7[%c2, %c0_21] : memref<8x128xf32, #tpu.memory_space<vmem>>, vector<1x128xf32>
      %cst_22 = arith.constant dense<0.000000e+00> : vector<8xf32>
      %26 = vector.multi_reduction <add>, %23, %cst_22 [1] : vector<8x128xf32> to vector<8xf32>
      %27 = vector.shape_cast %26 : vector<8xf32> to vector<8x1xf32>
      %28 = arith.mulf %23, %23 : vector<8x128xf32>
      %cst_23 = arith.constant dense<0.000000e+00> : vector<8xf32>
      %29 = vector.multi_reduction <add>, %28, %cst_23 [1] : vector<8x128xf32> to vector<8xf32>
      %30 = vector.shape_cast %29 : vector<8xf32> to vector<8x1xf32>
      %cst_24 = arith.constant 3.125000e-02 : f32
      %31 = vector.broadcast %cst_24 : f32 to vector<8x1xf32>
      %32 = arith.mulf %27, %31 : vector<8x1xf32>
      %cst_25 = arith.constant 3.125000e-02 : f32
      %33 = vector.broadcast %cst_25 : f32 to vector<8x1xf32>
      %34 = arith.mulf %30, %33 : vector<8x1xf32>
      %35 = arith.mulf %32, %32 : vector<8x1xf32>
      %36 = arith.subf %34, %35 : vector<8x1xf32>
      %cst_26 = arith.constant 0.000000e+00 : f32
      %37 = vector.broadcast %cst_26 : f32 to vector<8x1xf32>
      %38 = arith.maximumf %36, %37 : vector<8x1xf32>
      %39 = vector.broadcast %32 : vector<8x1xf32> to vector<8x128xf32>
      %40 = arith.subf %23, %39 : vector<8x128xf32>
      %cst_27 = arith.constant 9.99999974E-6 : f32
      %41 = vector.broadcast %cst_27 : f32 to vector<8x1xf32>
      %42 = arith.addf %38, %41 : vector<8x1xf32>
      %43 = math.rsqrt %42 : vector<8x1xf32>
      %44 = vector.broadcast %43 : vector<8x1xf32> to vector<8x128xf32>
      %45 = arith.mulf %40, %44 : vector<8x128xf32>
      %46 = vector.broadcast %24 : vector<1x128xf32> to vector<8x128xf32>
      %47 = arith.mulf %45, %46 : vector<8x128xf32>
      %48 = vector.broadcast %25 : vector<1x128xf32> to vector<8x128xf32>
      %49 = arith.addf %47, %48 : vector<8x128xf32>
      %c0_28 = arith.constant 0 : index
      %c0_29 = arith.constant 0 : index
      %50 = vector.load %arg9[%c0_28, %c0_29] : memref<8x128xf32, #tpu.memory_space<vmem>>, vector<8x128xf32>
      tpu.vector_store %arg9[%c0_28, %c0_29], %49 {strides = array<i32>} : memref<8x128xf32, #tpu.memory_space<vmem>>, vector<8x128xf32>,
      %cst_30 = arith.constant 0.000000e+00 : f32
      %51 = vector.broadcast %cst_30 : f32 to vector<8x128xf32>
      %c0_31 = arith.constant 0 : index
      %c0_32 = arith.constant 0 : index
      %52 = vector.load %arg10[%c0_31, %c0_32] : memref<8x128xf32, #tpu.memory_space<vmem>>, vector<8x128xf32>
      tpu.vector_store %arg10[%c0_31, %c0_32], %51 {strides = array<i32>} : memref<8x128xf32, #tpu.memory_space<vmem>>, vector<8x128xf32>,
    } else {
    }
    %c0 = arith.constant 0 : index
    %c0_1 = arith.constant 0 : index
    %3 = vector.load %arg9[%c0, %c0_1] : memref<8x128xf32, #tpu.memory_space<vmem>>, vector<8x128xf32>
    %4 = arith.truncf %3 : vector<8x128xf32> to vector<8x128xbf16>
    %c0_2 = arith.constant 0 : index
    %c0_3 = arith.constant 0 : index
    %5 = vector.load %arg4[%c0_2, %c0_3] : memref<128x128xbf16, #tpu.memory_space<vmem>>, vector<128x128xbf16>
    %cst = arith.constant dense<0.000000e+00> : vector<8x128xf32>
    %6 = tpu.matmul %4, %5, %cst {dimension_numbers = #tpu.dot_dimension_numbers<[1], [0], [0], [1], [0, 0, 1, 1], [], []>} : vector<8x128xbf16>, vector<128x128xbf16>, vector<8x128xf32> -> vector<8x128xf32>
    %c0_4 = arith.constant 0 : index
    %c0_5 = arith.constant 0 : index
    %7 = vector.load %arg5[%c0_4, %c0_5] : memref<1x128xf32, #tpu.memory_space<vmem>>, vector<1x128xf32>
    %8 = vector.broadcast %7 : vector<1x128xf32> to vector<8x128xf32>
    %9 = arith.addf %6, %8 : vector<8x128xf32>
    %cst_6 = arith.constant 0.000000e+00 : f32
    %10 = vector.broadcast %cst_6 : f32 to vector<8x128xf32>
    %11 = arith.maximumf %9, %10 : vector<8x128xf32>
    %c0_7 = arith.constant 0 : index
    %c0_8 = arith.constant 0 : index
    %12 = vector.load %arg10[%c0_7, %c0_8] : memref<8x128xf32, #tpu.memory_space<vmem>>, vector<8x128xf32>
    %13 = arith.truncf %11 : vector<8x128xf32> to vector<8x128xbf16>
    %c0_9 = arith.constant 0 : index
    %c0_10 = arith.constant 0 : index
    %14 = vector.load %arg6[%c0_9, %c0_10] : memref<128x128xbf16, #tpu.memory_space<vmem>>, vector<128x128xbf16>
    %cst_11 = arith.constant dense<0.000000e+00> : vector<8x128xf32>
    %15 = tpu.matmul %13, %14, %cst_11 {dimension_numbers = #tpu.dot_dimension_numbers<[1], [0], [0], [1], [0, 0, 1, 1], [], []>} : vector<8x128xbf16>, vector<128x128xbf16>, vector<8x128xf32> -> vector<8x128xf32>
    %16 = arith.addf %12, %15 : vector<8x128xf32>
    %c0_12 = arith.constant 0 : index
    %c0_13 = arith.constant 0 : index
    %17 = vector.load %arg10[%c0_12, %c0_13] : memref<8x128xf32, #tpu.memory_space<vmem>>, vector<8x128xf32>
    tpu.vector_store %arg10[%c0_12, %c0_13], %16 {strides = array<i32>} : memref<8x128xf32, #tpu.memory_space<vmem>>, vector<8x128xf32>,
    %c0_i32_14 = arith.constant 0 : i32
    %18 = arith.cmpi eq, %arg1, %c0_i32_14 : i32
    %19 = arith.extui %18 : i1 to i32
    %c0_i32_15 = arith.constant 0 : i32
    %20 = arith.cmpi ne, %19, %c0_i32_15 : i32
    scf.if %20 {
      %c0_16 = arith.constant 0 : index
      %c0_17 = arith.constant 0 : index
      %21 = vector.load %arg10[%c0_16, %c0_17] : memref<8x128xf32, #tpu.memory_space<vmem>>, vector<8x128xf32>
      %c0_18 = arith.constant 0 : index
      %c0_19 = arith.constant 0 : index
      %22 = vector.load %arg7[%c0_18, %c0_19] : memref<8x128xf32, #tpu.memory_space<vmem>>, vector<1x128xf32>
      %23 = vector.broadcast %22 : vector<1x128xf32> to vector<8x128xf32>
      %24 = arith.addf %21, %23 : vector<8x128xf32>
      %c0_20 = arith.constant 0 : index
      %c0_21 = arith.constant 0 : index
      %25 = vector.load %arg9[%c0_20, %c0_21] : memref<8x128xf32, #tpu.memory_space<vmem>>, vector<8x128xf32>
      %26 = arith.addf %25, %24 : vector<8x128xf32>
      %c3 = arith.constant 3 : index
      %c0_22 = arith.constant 0 : index
      %27 = vector.load %arg7[%c3, %c0_22] : memref<8x128xf32, #tpu.memory_space<vmem>>, vector<1x128xf32>
      %c4 = arith.constant 4 : index
      %c0_23 = arith.constant 0 : index
      %28 = vector.load %arg7[%c4, %c0_23] : memref<8x128xf32, #tpu.memory_space<vmem>>, vector<1x128xf32>
      %cst_24 = arith.constant dense<0.000000e+00> : vector<8xf32>
      %29 = vector.multi_reduction <add>, %26, %cst_24 [1] : vector<8x128xf32> to vector<8xf32>
      %30 = vector.shape_cast %29 : vector<8xf32> to vector<8x1xf32>
      %31 = arith.mulf %26, %26 : vector<8x128xf32>
      %cst_25 = arith.constant dense<0.000000e+00> : vector<8xf32>
      %32 = vector.multi_reduction <add>, %31, %cst_25 [1] : vector<8x128xf32> to vector<8xf32>
      %33 = vector.shape_cast %32 : vector<8xf32> to vector<8x1xf32>
      %cst_26 = arith.constant 3.125000e-02 : f32
      %34 = vector.broadcast %cst_26 : f32 to vector<8x1xf32>
      %35 = arith.mulf %30, %34 : vector<8x1xf32>
      %cst_27 = arith.constant 3.125000e-02 : f32
      %36 = vector.broadcast %cst_27 : f32 to vector<8x1xf32>
      %37 = arith.mulf %33, %36 : vector<8x1xf32>
      %38 = arith.mulf %35, %35 : vector<8x1xf32>
      %39 = arith.subf %37, %38 : vector<8x1xf32>
      %cst_28 = arith.constant 0.000000e+00 : f32
      %40 = vector.broadcast %cst_28 : f32 to vector<8x1xf32>
      %41 = arith.maximumf %39, %40 : vector<8x1xf32>
      %42 = vector.broadcast %35 : vector<8x1xf32> to vector<8x128xf32>
      %43 = arith.subf %26, %42 : vector<8x128xf32>
      %cst_29 = arith.constant 9.99999974E-6 : f32
      %44 = vector.broadcast %cst_29 : f32 to vector<8x1xf32>
      %45 = arith.addf %41, %44 : vector<8x1xf32>
      %46 = math.rsqrt %45 : vector<8x1xf32>
      %47 = vector.broadcast %46 : vector<8x1xf32> to vector<8x128xf32>
      %48 = arith.mulf %43, %47 : vector<8x128xf32>
      %49 = vector.broadcast %27 : vector<1x128xf32> to vector<8x128xf32>
      %50 = arith.mulf %48, %49 : vector<8x128xf32>
      %51 = vector.broadcast %28 : vector<1x128xf32> to vector<8x128xf32>
      %52 = arith.addf %50, %51 : vector<8x128xf32>
      %c0_30 = arith.constant 0 : index
      %c0_31 = arith.constant 0 : index
      %53 = vector.load %arg8[%c0_30, %c0_31] : memref<8x128xf32, #tpu.memory_space<vmem>>, vector<8x128xf32>
      tpu.vector_store %arg8[%c0_30, %c0_31], %52 {strides = array<i32>} : memref<8x128xf32, #tpu.memory_space<vmem>>, vector<8x128xf32>,
    } else {
    }
    return
  }
  func.func @transform_0(%arg0: i32, %arg1: i32) -> (i32, i32) {
    %c0_i32 = arith.constant 0 : i32
    %c0_i32_0 = arith.constant 0 : i32
    return %arg0, %c0_i32 : i32, i32
  }
  func.func @transform_1(%arg0: i32, %arg1: i32) -> (i32, i32) {
    %c0_i32 = arith.constant 0 : i32
    %c0_i32_0 = arith.constant 0 : i32
    return %arg0, %c0_i32 : i32, i32
  }
  func.func @transform_2(%arg0: i32, %arg1: i32) -> (i32, i32) {
    %c0_i32 = arith.constant 0 : i32
    %c0_i32_0 = arith.constant 0 : i32
    %c0_i32_1 = arith.constant 0 : i32
    return %c0_i32, %c0_i32_0 : i32, i32
  }
  func.func @transform_3(%arg0: i32, %arg1: i32) -> (i32, i32) {
    %c0_i32 = arith.constant 0 : i32
    %c0_i32_0 = arith.constant 0 : i32
    %c0_i32_1 = arith.constant 0 : i32
    return %c0_i32, %c0_i32_0 : i32, i32
  }
  func.func @transform_4(%arg0: i32, %arg1: i32) -> (i32, i32) {
    %c0_i32 = arith.constant 0 : i32
    %c0_i32_0 = arith.constant 0 : i32
    %c0_i32_1 = arith.constant 0 : i32
    return %c0_i32, %c0_i32_0 : i32, i32
  }
  func.func @transform_5(%arg0: i32, %arg1: i32) -> (i32, i32) {
    %c0_i32 = arith.constant 0 : i32
    %c0_i32_0 = arith.constant 0 : i32
    %c0_i32_1 = arith.constant 0 : i32
    return %c0_i32, %c0_i32_0 : i32, i32
  }
  func.func @transform_6(%arg0: i32, %arg1: i32) -> (i32, i32) {
    %c0_i32 = arith.constant 0 : i32
    %c0_i32_0 = arith.constant 0 : i32
    return %arg0, %c0_i32 : i32, i32
  }
}

</mosaic_0001>

<llo_original>
// kernel: tpu_custom_call.1
$region0: #{tpu_custom_call.1}
  #allocation0 [shape = 'u32[]', space=smem, size = 0x4, offset = 0x4, fixed_abs, tag = 'smem constant byte address 0x4 - core index']
  #allocation1 [shape = 'u32[144,128]{1,0:T(1,128)}', space=vmem, size = 0x12000, scoped, tag = 'internal scratch']
  #allocation2 [shape = 'f32[8,128]{1,0:T(8,128)}', space=vmem, size = 0x1000, scoped, tag = 'scratch operand']
  #allocation3 [shape = 'f32[8,128]{1,0:T(8,128)}', space=vmem, size = 0x1000, scoped, tag = 'scratch operand']
  %s0 = inlined_call_operand.hbm [shape: f32[16,128], index: 0, kind: input, shape index: {}]
  %s1 = inlined_call_operand.hbm [shape: f32[16,128], index: 1, kind: input, shape index: {}]
  %s2 = inlined_call_operand.hbm [shape: bf16[128,128], index: 2, kind: input, shape index: {}]
  %s3 = inlined_call_operand.vmem [shape: f32[1,128], index: 3, kind: input, shape index: {}]
  %s4 = inlined_call_operand.hbm [shape: bf16[128,128], index: 4, kind: input, shape index: {}]
  %s5 = inlined_call_operand.vmem [shape: f32[8,128], index: 5, kind: input, shape index: {}]
  %s6 = inlined_call_operand.hbm [shape: f32[16,128], index: 6, kind: output, shape index: {}]
  %s7 = sld [smem:[#allocation0]]
  $region81: #{tpu_custom_call.1} parent=0
    _
  %s9 = ssub.s32 1, %s7
  %s10 = scalar_select 0, %s9, %s7
  $region1: #{tpu_custom_call.1} parent=0
    #allocation4 [shape = 'u8[8192]{0}', space=vmem, size = 0x2000, scoped, tag = 'input window, operand 0']
    #allocation5 [shape = 's32[2]{0}', space=sflag, size = 0x8, scoped, tag = 'scoped memory for tpu_custom_call.1']
    #allocation6 [shape = 's32[2]{0}', space=sflag, size = 0x8, scoped, tag = 'scoped memory for tpu_custom_call.1']
    #allocation7 [shape = 'u8[8192]{0}', space=vmem, size = 0x2000, scoped, tag = 'input window, operand 1']
    #allocation8 [shape = 's32[2]{0}', space=sflag, size = 0x8, scoped, tag = 'scoped memory for tpu_custom_call.1']
    #allocation9 [shape = 'u8[32768]{0}', space=vmem, size = 0x8000, scoped, tag = 'input window, operand 2, single buffered']
    #allocation10 [shape = 'u8[32768]{0}', space=vmem, size = 0x8000, scoped, tag = 'input window, operand 4, single buffered']
    #allocation11 [shape = 's32[1]{0}', space=sflag, size = 0x4, scoped, tag = 'scoped memory for tpu_custom_call.1']
    #allocation12 [shape = 'u8[8192]{0}', space=vmem, size = 0x2000, scoped, tag = 'output window, operand 0']
    %11 = vsyncpa [#allocation5], 0
    %s12 = scalar_lea.sflag [#allocation5], 1
    %13 = vsyncpa %s12, 0
    %14 = vsyncpa [#allocation8], 0
    %s15 = scalar_lea.sflag [#allocation8], 1
    %16 = vsyncpa %s15, 0
    %17 = vsyncpa [#allocation11], 0
    %18 = vsyncpa [#allocation6], 0
    %s19 = scalar_lea.sflag [#allocation6], 1
    %20 = vsyncpa %s19, 0
    loop: start=0, step=1, limit=4
    $region2: #{tpu_custom_call.1} parent=1 // loop_pre_header
      _
    $region3: #{tpu_custom_call.1} parent=1 // loop_header
      %s22 = sphi 0, %s26
      %p23 = scmp.ge.s32.totalorder %s22, 4
      %s29 = sphi 0, %s41
      %s30 = sphi 0, %s37
      %s31 = sphi 0, %s29
      %s32 = sphi 0, %s30
      %s33 = sphi 0, %s31
      %s34 = sphi 0, %s32
      %s44 = sphi 0, %s46
      %s47 = sphi 0, %s44
      %s48 = sphi 0, %s47
      %s64 = sphi 0, %s48
      %s70 = sphi 0, %s72
      %s73 = sphi 0, %s70
      %s74 = sphi 0, %s73
      %s90 = sphi 0, %s74
      %s94 = sphi 0, %s94
      %s96 = sphi 0, %s94
      %s97 = sphi 0, %s96
      %s111 = sphi 0, %s97
      %s115 = sphi 0, %s115
      %s117 = sphi 0, %s115
      %s118 = sphi 0, %s117
      %s132 = sphi 0, %s118
      %s136 = sphi 0, %s136
      %s138 = sphi 0, %s136
      %s139 = sphi 0, %s138
      %s153 = sphi 0, %s139
      %s157 = sphi 0, %s157
      %s159 = sphi 0, %s157
      %s160 = sphi 0, %s159
      %s174 = sphi 0, %s160
      %s180 = sphi 0, %s182
      %s183 = sphi 0, %s180
      %s184 = sphi 0, %s183
      %s200 = sphi 0, %s184
    $region4: #{tpu_custom_call.1} parent=1 // loop_header_branch
      %25 = sbr.rel (%p23) target = $region8
    $region5: #{tpu_custom_call.1} parent=1 // loop_body
      %s27 = ssub.s32 %s22, 1
      %s28 = ssub.s32 %s22, 2
      %s35 = sadd.s32 1, %s30
      %p36 = scmp.ge.s32.totalorder %s35, 1
      %s37 = scalar_select %p36, 0, %s35
      %s38 = sadd.s32 1, %s29
      %s39 = scalar_select %p36, %s38, %s29
      %p40 = scmp.ge.s32.totalorder %s39, 2
      %s41 = scalar_select %p40, 0, %s39
      %s42 = ssub.s32 %s29, %s41
      %p43 = scmp.eq.s32.totalorder %s42, 0
      %s45 = sadd.s32 %s44, 1
      %s46 = scalar_select %p43, %s44, %s45
      %p49 = pneg %p43
      %p50 = scmp.eq.s32.totalorder %s22, 1
      %p51 = por %p49, %p50
      %p52 = scmp.ne.s32.totalorder %s44, %s47
      %p53 = scmp.eq.s32.totalorder %s22, 0
      %p54 = por %p52, %p53
      %p55 = scmp.ne.s32.totalorder %s44, %s47
      %p56 = scmp.eq.s32.totalorder %s27, 1
      %p57 = por %p55, %p56
      %p58 = scmp.ne.s32.totalorder %s47, %s48
      %p59 = scmp.eq.s32.totalorder %s27, 0
      %p60 = por %p58, %p59
      %p61 = scmp.ne.s32.totalorder %s47, %s48
      %p62 = scmp.eq.s32.totalorder %s28, 1
      %p63 = por %p61, %p62
      %p65 = scmp.ne.s32.totalorder %s48, %s64
      %p66 = scmp.eq.s32.totalorder %s28, 0
      %p67 = por %p65, %p66
      %s68 = ssub.s32 %s29, %s41
      %p69 = scmp.eq.s32.totalorder %s68, 0
      %s71 = sadd.s32 %s70, 1
      %s72 = scalar_select %p69, %s70, %s71
      %p75 = pneg %p69
      %p76 = scmp.eq.s32.totalorder %s22, 1
      %p77 = por %p75, %p76
      %p78 = scmp.ne.s32.totalorder %s70, %s73
      %p79 = scmp.eq.s32.totalorder %s22, 0
      %p80 = por %p78, %p79
      %p81 = scmp.ne.s32.totalorder %s70, %s73
      %p82 = scmp.eq.s32.totalorder %s27, 1
      %p83 = por %p81, %p82
      %p84 = scmp.ne.s32.totalorder %s73, %s74
      %p85 = scmp.eq.s32.totalorder %s27, 0
      %p86 = por %p84, %p85
      %p87 = scmp.ne.s32.totalorder %s73, %s74
      %p88 = scmp.eq.s32.totalorder %s28, 1
      %p89 = por %p87, %p88
      %p91 = scmp.ne.s32.totalorder %s74, %s90
      %p92 = scmp.eq.s32.totalorder %s28, 0
      %p93 = por %p91, %p92
      %s95 = sadd.s32 %s94, 1
      %p98 = scmp.eq.s32.totalorder %s22, 1
      %p99 = scmp.ne.s32.totalorder %s94, %s96
      %p100 = scmp.eq.s32.totalorder %s22, 0
      %p101 = por %p99, %p100
      %p102 = scmp.ne.s32.totalorder %s94, %s96
      %p103 = scmp.eq.s32.totalorder %s27, 1
      %p104 = por %p102, %p103
      %p105 = scmp.ne.s32.totalorder %s96, %s97
      %p106 = scmp.eq.s32.totalorder %s27, 0
      %p107 = por %p105, %p106
      %p108 = scmp.ne.s32.totalorder %s96, %s97
      %p109 = scmp.eq.s32.totalorder %s28, 1
      %p110 = por %p108, %p109
      %p112 = scmp.ne.s32.totalorder %s97, %s111
      %p113 = scmp.eq.s32.totalorder %s28, 0
      %p114 = por %p112, %p113
      %s116 = sadd.s32 %s115, 1
      %p119 = scmp.eq.s32.totalorder %s22, 1
      %p120 = scmp.ne.s32.totalorder %s115, %s117
      %p121 = scmp.eq.s32.totalorder %s22, 0
      %p122 = por %p120, %p121
      %p123 = scmp.ne.s32.totalorder %s115, %s117
      %p124 = scmp.eq.s32.totalorder %s27, 1
      %p125 = por %p123, %p124
      %p126 = scmp.ne.s32.totalorder %s117, %s118
      %p127 = scmp.eq.s32.totalorder %s27, 0
      %p128 = por %p126, %p127
      %p129 = scmp.ne.s32.totalorder %s117, %s118
      %p130 = scmp.eq.s32.totalorder %s28, 1
      %p131 = por %p129, %p130
      %p133 = scmp.ne.s32.totalorder %s118, %s132
      %p134 = scmp.eq.s32.totalorder %s28, 0
      %p135 = por %p133, %p134
      %s137 = sadd.s32 %s136, 1
      %p140 = scmp.eq.s32.totalorder %s22, 1
      %p141 = scmp.ne.s32.totalorder %s136, %s138
      %p142 = scmp.eq.s32.totalorder %s22, 0
      %p143 = por %p141, %p142
      %p144 = scmp.ne.s32.totalorder %s136, %s138
      %p145 = scmp.eq.s32.totalorder %s27, 1
      %p146 = por %p144, %p145
      %p147 = scmp.ne.s32.totalorder %s138, %s139
      %p148 = scmp.eq.s32.totalorder %s27, 0
      %p149 = por %p147, %p148
      %p150 = scmp.ne.s32.totalorder %s138, %s139
      %p151 = scmp.eq.s32.totalorder %s28, 1
      %p152 = por %p150, %p151
      %p154 = scmp.ne.s32.totalorder %s139, %s153
      %p155 = scmp.eq.s32.totalorder %s28, 0
      %p156 = por %p154, %p155
      %s158 = sadd.s32 %s157, 1
      %p161 = scmp.eq.s32.totalorder %s22, 1
      %p162 = scmp.ne.s32.totalorder %s157, %s159
      %p163 = scmp.eq.s32.totalorder %s22, 0
      %p164 = por %p162, %p163
      %p165 = scmp.ne.s32.totalorder %s157, %s159
      %p166 = scmp.eq.s32.totalorder %s27, 1
      %p167 = por %p165, %p166
      %p168 = scmp.ne.s32.totalorder %s159, %s160
      %p169 = scmp.eq.s32.totalorder %s27, 0
      %p170 = por %p168, %p169
      %p171 = scmp.ne.s32.totalorder %s159, %s160
      %p172 = scmp.eq.s32.totalorder %s28, 1
      %p173 = por %p171, %p172
      %p175 = scmp.ne.s32.totalorder %s160, %s174
      %p176 = scmp.eq.s32.totalorder %s28, 0
      %p177 = por %p175, %p176
      %s178 = ssub.s32 %s29, %s41
      %p179 = scmp.eq.s32.totalorder %s178, 0
      %s181 = sadd.s32 %s180, 1
      %s182 = scalar_select %p179, %s180, %s181
      %p185 = pneg %p179
      %p186 = scmp.eq.s32.totalorder %s22, 1
      %p187 = por %p185, %p186
      %p188 = scmp.ne.s32.totalorder %s180, %s183
      %p189 = scmp.eq.s32.totalorder %s22, 0
      %p190 = por %p188, %p189
      %p191 = scmp.ne.s32.totalorder %s180, %s183
      %p192 = scmp.eq.s32.totalorder %s27, 1
      %p193 = por %p191, %p192
      %p194 = scmp.ne.s32.totalorder %s183, %s184
      %p195 = scmp.eq.s32.totalorder %s27, 0
      %p196 = por %p194, %p195
      %p197 = scmp.ne.s32.totalorder %s183, %s184
      %p198 = scmp.eq.s32.totalorder %s28, 1
      %p199 = por %p197, %p198
      %p201 = scmp.ne.s32.totalorder %s184, %s200
      %p202 = scmp.eq.s32.totalorder %s28, 0
      %p203 = por %p201, %p202
      %p204 = scmp.le.s32.totalorder 1, %s22
      %p205 = scmp.lt.s32.totalorder %s22, 3
      %p206 = pnand %p204, %p205
      %p207 = pneg %p206
      // Predicated region
      $region9: #{tpu_custom_call.1} parent=5 // pred_check
        _
      $region10: #{tpu_custom_call.1} parent=5 // pred_check_branch
        %209 = sbr.rel (%p206) target = $region12
      $region11: #{tpu_custom_call.1} parent=5 // pred_region
        %s210 = ssub.s32 %s22, 1
        // Predicated region
        $region13: #{tpu_custom_call.1} parent=11 // pred_check
          %p211 = pneg %p107
        $region14: #{tpu_custom_call.1} parent=11 // pred_check_branch
          %213 = sbr.rel (%p211) target = $region16
        $region15: #{tpu_custom_call.1} parent=11 // pred_region
          %s215 = ssub.s32 1024, 1024
          %216 = vsyncadd [#allocation8], %s215
          %s217 = sshll.u32 [#allocation9], 4
          %s218 = int_to_ptr.vmem [resolvable:$true] %s217
          %223 = dma.hbm_to_vmem [thread:$0]  %s2, 1024, %s218, [#allocation8], 64, 64, 4
        $region16: #{tpu_custom_call.1} parent=11 // pred_fallthru
          _
        // Predicated region
        $region17: #{tpu_custom_call.1} parent=11 // pred_check
          %p224 = pneg %p128
        $region18: #{tpu_custom_call.1} parent=11 // pred_check_branch
          %226 = sbr.rel (%p224) target = $region20
        $region19: #{tpu_custom_call.1} parent=11 // pred_region
          _
        $region20: #{tpu_custom_call.1} parent=11 // pred_fallthru
          _
        // Predicated region
        $region21: #{tpu_custom_call.1} parent=11 // pred_check
          %p227 = pneg %p149
        $region22: #{tpu_custom_call.1} parent=11 // pred_check_branch
          %229 = sbr.rel (%p227) target = $region24
        $region23: #{tpu_custom_call.1} parent=11 // pred_region
          %s231 = ssub.s32 1024, 1024
          %232 = vsyncadd [#allocation11], %s231
          %s233 = sshll.u32 [#allocation10], 4
          %s234 = int_to_ptr.vmem [resolvable:$true] %s233
          %239 = dma.hbm_to_vmem [thread:$0]  %s4, 1024, %s234, [#allocation11], 64, 64, 4
        $region24: #{tpu_custom_call.1} parent=11 // pred_fallthru
          _
        // Predicated region
        $region25: #{tpu_custom_call.1} parent=11 // pred_check
          %p240 = pneg %p170
        $region26: #{tpu_custom_call.1} parent=11 // pred_check_branch
          %242 = sbr.rel (%p240) target = $region28
        $region27: #{tpu_custom_call.1} parent=11 // pred_region
          _
        $region28: #{tpu_custom_call.1} parent=11 // pred_fallthru
          _
      $region12: #{tpu_custom_call.1} parent=5 // pred_fallthru
        _
      %p243 = scmp.lt.s32.totalorder %s22, 2
      // Predicated region
      $region29: #{tpu_custom_call.1} parent=5 // pred_check
        %p244 = pneg %p243
      $region30: #{tpu_custom_call.1} parent=5 // pred_check_branch
        %246 = sbr.rel (%p244) target = $region32
      $region31: #{tpu_custom_call.1} parent=5 // pred_region
        // Predicated region
        $region33: #{tpu_custom_call.1} parent=31 // pred_check
          %p247 = pneg %p54
        $region34: #{tpu_custom_call.1} parent=31 // pred_check_branch
          %249 = sbr.rel (%p247) target = $region36
        $region35: #{tpu_custom_call.1} parent=31 // pred_region
          %s250 = sand.u32 %s44, 1
          %s251 = scalar_lea.sflag [#allocation5], %s250
          %s252 = sand.u32 %s44, 1
          %s253 = smul.addr %s252, 8
          %s254 = scalar_lea.vmem [#allocation4], %s253
          %s256 = ssub.s32 128, 128
          %257 = vsyncadd %s251, %s256
          %s258 = smul.addr %s29, 128
          %s259 = scalar_lea.hbm %s0, %s258
          %s261 = sshll.u32 %s254, 4
          %s262 = int_to_ptr.vmem [resolvable:$true] %s261
          %264 = dma.hbm_to_vmem [thread:$0]  %s259, 128, %s262, %s251
        $region36: #{tpu_custom_call.1} parent=31 // pred_fallthru
          _
        // Predicated region
        $region37: #{tpu_custom_call.1} parent=31 // pred_check
          %p265 = pneg %p80
        $region38: #{tpu_custom_call.1} parent=31 // pred_check_branch
          %267 = sbr.rel (%p265) target = $region40
        $region39: #{tpu_custom_call.1} parent=31 // pred_region
          %s268 = sand.u32 %s22, 1
          %s269 = scalar_lea.sflag [#allocation8], %s268
          %s270 = sand.u32 %s70, 1
          %s271 = smul.addr %s270, 8
          %s272 = scalar_lea.vmem [#allocation7], %s271
          %s274 = ssub.s32 128, 128
          %275 = vsyncadd %s269, %s274
          %s276 = smul.addr %s29, 128
          %s277 = scalar_lea.hbm %s1, %s276
          %s279 = sshll.u32 %s272, 4
          %s280 = int_to_ptr.vmem [resolvable:$true] %s279
          %282 = dma.hbm_to_vmem [thread:$0]  %s277, 128, %s280, %s269
        $region40: #{tpu_custom_call.1} parent=31 // pred_fallthru
          _
      $region32: #{tpu_custom_call.1} parent=5 // pred_fallthru
        _
      %p283 = scmp.le.s32.totalorder 1, %s22
      %p284 = scmp.lt.s32.totalorder %s22, 3
      %p285 = pnand %p283, %p284
      %p286 = pneg %p285
      // Predicated region
      $region41: #{tpu_custom_call.1} parent=5 // pred_check
        _
      $region42: #{tpu_custom_call.1} parent=5 // pred_check_branch
        %288 = sbr.rel (%p285) target = $region44
      $region43: #{tpu_custom_call.1} parent=5 // pred_region
        %s289 = ssub.s32 %s22, 1
        %s290 = sand.u32 %s47, 1
        %s291 = scalar_lea.sflag [#allocation5], %s290
        %s292 = sand.u32 %s47, 1
        %s293 = smul.addr %s292, 8
        %s294 = scalar_lea.vmem [#allocation4], %s293
        // Predicated region
        $region45: #{tpu_custom_call.1} parent=43 // pred_check
          %p295 = pneg %p60
        $region46: #{tpu_custom_call.1} parent=43 // pred_check_branch
          %297 = sbr.rel (%p295) target = $region48
        $region47: #{tpu_custom_call.1} parent=43 // pred_region
          %298 = dma.done %s291, 128
        $region48: #{tpu_custom_call.1} parent=43 // pred_fallthru
          _
        %s299 = sand.u32 %s27, 1
        %s300 = scalar_lea.sflag [#allocation8], %s299
        %s301 = sand.u32 %s73, 1
        %s302 = smul.addr %s301, 8
        %s303 = scalar_lea.vmem [#allocation7], %s302
        // Predicated region
        $region49: #{tpu_custom_call.1} parent=43 // pred_check
          %p304 = pneg %p86
        $region50: #{tpu_custom_call.1} parent=43 // pred_check_branch
          %306 = sbr.rel (%p304) target = $region52
        $region51: #{tpu_custom_call.1} parent=43 // pred_region
          %307 = dma.done %s300, 128
        $region52: #{tpu_custom_call.1} parent=43 // pred_fallthru
          _
        // Predicated region
        $region53: #{tpu_custom_call.1} parent=43 // pred_check
          %p308 = pneg %p107
        $region54: #{tpu_custom_call.1} parent=43 // pred_check_branch
          %310 = sbr.rel (%p308) target = $region56
        $region55: #{tpu_custom_call.1} parent=43 // pred_region
          %311 = dma.done [#allocation8], 1024
        $region56: #{tpu_custom_call.1} parent=43 // pred_fallthru
          _
        // Predicated region
        $region57: #{tpu_custom_call.1} parent=43 // pred_check
          %p312 = pneg %p149
        $region58: #{tpu_custom_call.1} parent=43 // pred_check_branch
          %314 = sbr.rel (%p312) target = $region60
        $region59: #{tpu_custom_call.1} parent=43 // pred_region
          %315 = dma.done [#allocation11], 1024
        $region60: #{tpu_custom_call.1} parent=43 // pred_fallthru
          _
        %s316 = sand.u32 %s47, 1
        %s317 = scalar_lea.sflag [#allocation5], %s316
        %s318 = sand.u32 %s47, 1
        %s319 = smul.addr %s318, 8
        %s320 = scalar_lea.vmem [#allocation4], %s319
        %p321 = pneg %p60
        %p322 = pneg %p57
        %s323 = sand.u32 %s27, 1
        %s324 = scalar_lea.sflag [#allocation8], %s323
        %s325 = sand.u32 %s73, 1
        %s326 = smul.addr %s325, 8
        %s327 = scalar_lea.vmem [#allocation7], %s326
        %p328 = pneg %p86
        %p329 = pneg %p83
        %p330 = pneg %p107
        %p331 = pneg %p104
        %p332 = pneg %p128
        %p333 = pneg %p125
        %p334 = pneg %p149
        %p335 = pneg %p146
        %p336 = pneg %p170
        %p337 = pneg %p167
        %p338 = pneg %p196
        %p339 = pneg %p193
        %s340 = sand.u32 %s183, 1
        %s341 = scalar_lea.sflag [#allocation6], %s340
        %s342 = sand.u32 %s183, 1
        %s343 = smul.addr %s342, 8
        %s344 = scalar_lea.vmem [#allocation12], %s343
        %p346 = scmp.eq.s32.totalorder %s32, 0
        // Predicated region
        $region61: #{tpu_custom_call.1} parent=43 // pred_check
          %p347 = pneg %p346
        $region62: #{tpu_custom_call.1} parent=43 // pred_check_branch
          %349 = sbr.rel (%p347) target = $region64
        $region63: #{tpu_custom_call.1} parent=43 // pred_region
          %v350 = vld [vmem:[%s303] sm:$0xff]
          %v351 = vld [vmem:[%s294] sm:$0xff]
          %v352 = vadd.f32 %v350, %v351
          %v353 = vld [vmem:[%s5 + $0x1] sm:$0x1]
          %v354 = vld [vmem:[%s5 + $0x2] sm:$0x1]
          %355 = vadd.xlane.f32.xlu0 %v352
          %v356 = vpop.xlane.xlu0 %355
          %v357 = vmul.f32 %v352, %v352
          %358 = vadd.xlane.f32.xlu0 %v357
          %v359 = vpop.xlane.xlu0 %358
          %v360 = vmul.f32 %v356, 0.03125
          %v361 = vmul.f32 %v359, 0.03125
          %v362 = vmul.f32 %v360, %v360
          %v363 = vsub.f32 %v361, %v362
          %v364 = vmax.f32 %v363, 0.0
          %v365 = vsub.f32 %v352, %v360
          %v366 = vadd.f32 %v364, 1e-05
          %v367 = vrsqrt.pop %v366
          %v368 = vmul.f32 %v365, %v367
          %v369 = vlaneseq
          %v370 = vshrl.u32 %v369, 7
          %v371 = vsub.s32 0, %v370
          %v372 = vrot.slane %v353, %v371
          %v373 = vmul.f32 %v368, %v372
          %v374 = vlaneseq
          %v375 = vshrl.u32 %v374, 7
          %v376 = vsub.s32 0, %v375
          %v377 = vrot.slane %v354, %v376
          %v378 = vadd.f32 %v373, %v377
          %379 = vst [vmem:[#allocation2] sm:$0xff] %v378
          %380 = vst [vmem:[#allocation3] sm:$0xff] 0.0
        $region64: #{tpu_custom_call.1} parent=43 // pred_fallthru
          _
        %v381 = vld [vmem:[#allocation2] sm:$0xff]
        %v382 = vpack.c.bf16 %v381, %v381
        %v383 = vld [vmem:[#allocation9] sm:$0xf]
        %v384 = vld [vmem:[#allocation9 + $0x4] sm:$0xf]
        %v385 = vld [vmem:[#allocation9 + $0x8] sm:$0xf]
        %v386 = vld [vmem:[#allocation9 + $0xc] sm:$0xf]
        %v387 = vld [vmem:[#allocation9 + $0x10] sm:$0xf]
        %v388 = vld [vmem:[#allocation9 + $0x14] sm:$0xf]
        %v389 = vld [vmem:[#allocation9 + $0x18] sm:$0xf]
        %v390 = vld [vmem:[#allocation9 + $0x1c] sm:$0xf]
        %v391 = vld [vmem:[#allocation9 + $0x20] sm:$0xf]
        %v392 = vld [vmem:[#allocation9 + $0x24] sm:$0xf]
        %v393 = vld [vmem:[#allocation9 + $0x28] sm:$0xf]
        %v394 = vld [vmem:[#allocation9 + $0x2c] sm:$0xf]
        %v395 = vld [vmem:[#allocation9 + $0x30] sm:$0xf]
        %v396 = vld [vmem:[#allocation9 + $0x34] sm:$0xf]
        %v397 = vld [vmem:[#allocation9 + $0x38] sm:$0xf]
        %v398 = vld [vmem:[#allocation9 + $0x3c] sm:$0xf]
        %v399 = vld [vmem:[%s3] sm:$0x1]
        %v401 = vlaneseq
        %v402 = vshrl.u32 %v401, 7
        %v403 = vsub.s32 0, %v402
        %v404 = vrot.slane %v399, %v403
        %v422 = vunpack.c.l.b16 %v383
        %v423 = vunpack.c.l.b16 %v384
        %v424 = vunpack.c.l.b16 %v385
        %v425 = vunpack.c.l.b16 %v386
        %v426 = vunpack.c.l.b16 %v387
        %v427 = vunpack.c.l.b16 %v388
        %v428 = vunpack.c.l.b16 %v389
        %v429 = vunpack.c.l.b16 %v390
        %v430 = vunpack.c.l.b16 %v391
        %v431 = vunpack.c.l.b16 %v392
        %v432 = vunpack.c.l.b16 %v393
        %v433 = vunpack.c.l.b16 %v394
        %v434 = vunpack.c.l.b16 %v395
        %v435 = vunpack.c.l.b16 %v396
        %v436 = vunpack.c.l.b16 %v397
        %v437 = vunpack.c.l.b16 %v398
        %v438 = vpack.c.b16 %v423, %v422
        %v439 = vpack.c.b16 %v425, %v424
        %v440 = vpack.c.b16 %v427, %v426
        %v441 = vpack.c.b16 %v429, %v428
        %v442 = vpack.c.b16 %v431, %v430
        %v443 = vpack.c.b16 %v433, %v432
        %v444 = vpack.c.b16 %v435, %v434
        %v445 = vpack.c.b16 %v437, %v436
        %454 = vmatprep.subr.bf16.mxu0 0
        %455 = vmatpush1.bf16.msra.mxu0 %v438
        %456 = vmatprep.subr.bf16.mxu0 0
        %457 = vmatpush1.bf16.msra.mxu0 %v439
        %458 = vmatprep.subr.bf16.mxu0 0
        %459 = vmatpush1.bf16.msra.mxu0 %v440
        %460 = vmatprep.subr.bf16.mxu0 0
        %461 = vmatpush1.bf16.msra.mxu0 %v441
        %462 = vmatprep.subr.bf16.mxu0 0
        %463 = vmatpush1.bf16.msra.mxu0 %v442
        %464 = vmatprep.subr.bf16.mxu0 0
        %465 = vmatpush1.bf16.msra.mxu0 %v443
        %466 = vmatprep.subr.bf16.mxu0 0
        %467 = vmatpush1.bf16.msra.mxu0 %v444
        %468 = vmatprep.subr.bf16.mxu0 0
        %469 = vmatpush1.bf16.msra.mxu0 %v445
        %470 = vmatprep.subr.bf16.mxu0 0
        %471 = vmatpush1.bf16.msra.mxu0 0
        %472 = vmatprep.subr.bf16.mxu0 0
        %473 = vmatpush1.bf16.msra.mxu0 0
        %474 = vmatprep.subr.bf16.mxu0 0
        %475 = vmatpush1.bf16.msra.mxu0 0
        %476 = vmatprep.subr.bf16.mxu0 0
        %477 = vmatpush1.bf16.msra.mxu0 0
        %478 = vmatprep.subr.bf16.mxu0 0
        %479 = vmatpush1.bf16.msra.mxu0 0
        %480 = vmatprep.subr.bf16.mxu0 0
        %481 = vmatpush1.bf16.msra.mxu0 0
        %482 = vmatprep.subr.bf16.mxu0 0
        %483 = vmatpush1.bf16.msra.mxu0 0
        %484 = vmatprep.subr.bf16.mxu0 0
        %485 = vmatpush1.bf16.msra.mxu0 0
        %486 = vmatprep.mubr.bf16.mxu0 0
        %487 = vmatmul.mubr.bf16.gmra.mrb[0].mxu0 %v382
        %v488 = vpop.f32.mrb[0].mxu0
        %v489 = vadd.f32 %v404, %v488
        %v490 = vpop.f32.mrb[0].mxu0
        %v491 = vpop.f32.mrb[0].mxu0
        %v492 = vpop.f32.mrb[0].mxu0
        %493 = vdwg.mxu0
        %v494 = vmax.f32 %v489, 0.0
        %v495 = vld [vmem:[#allocation3] sm:$0xff]
        %v496 = vpack.c.bf16 %v494, %v494
        %v497 = vld [vmem:[#allocation10] sm:$0xf]
        %v498 = vld [vmem:[#allocation10 + $0x4] sm:$0xf]
        %v499 = vld [vmem:[#allocation10 + $0x8] sm:$0xf]
        %v500 = vld [vmem:[#allocation10 + $0xc] sm:$0xf]
        %v501 = vld [vmem:[#allocation10 + $0x10] sm:$0xf]
        %v502 = vld [vmem:[#allocation10 + $0x14] sm:$0xf]
        %v503 = vld [vmem:[#allocation10 + $0x18] sm:$0xf]
        %v504 = vld [vmem:[#allocation10 + $0x1c] sm:$0xf]
        %v505 = vld [vmem:[#allocation10 + $0x20] sm:$0xf]
        %v506 = vld [vmem:[#allocation10 + $0x24] sm:$0xf]
        %v507 = vld [vmem:[#allocation10 + $0x28] sm:$0xf]
        %v508 = vld [vmem:[#allocation10 + $0x2c] sm:$0xf]
        %v509 = vld [vmem:[#allocation10 + $0x30] sm:$0xf]
        %v510 = vld [vmem:[#allocation10 + $0x34] sm:$0xf]
        %v511 = vld [vmem:[#allocation10 + $0x38] sm:$0xf]
        %v512 = vld [vmem:[#allocation10 + $0x3c] sm:$0xf]
        %v529 = vunpack.c.l.b16 %v497
        %v530 = vunpack.c.l.b16 %v498
        %v531 = vunpack.c.l.b16 %v499
        %v532 = vunpack.c.l.b16 %v500
        %v533 = vunpack.c.l.b16 %v501
        %v534 = vunpack.c.l.b16 %v502
        %v535 = vunpack.c.l.b16 %v503
        %v536 = vunpack.c.l.b16 %v504
        %v537 = vunpack.c.l.b16 %v505
        %v538 = vunpack.c.l.b16 %v506
        %v539 = vunpack.c.l.b16 %v507
        %v540 = vunpack.c.l.b16 %v508
        %v541 = vunpack.c.l.b16 %v509
        %v542 = vunpack.c.l.b16 %v510
        %v543 = vunpack.c.l.b16 %v511
        %v544 = vunpack.c.l.b16 %v512
        %v545 = vpack.c.b16 %v530, %v529
        %v546 = vpack.c.b16 %v532, %v531
        %v547 = vpack.c.b16 %v534, %v533
        %v548 = vpack.c.b16 %v536, %v535
        %v549 = vpack.c.b16 %v538, %v537
        %v550 = vpack.c.b16 %v540, %v539
        %v551 = vpack.c.b16 %v542, %v541
        %v552 = vpack.c.b16 %v544, %v543
        %561 = vmatprep.subr.bf16.mxu0 0
        %562 = vmatpush1.bf16.msra.mxu0 %v545
        %563 = vmatprep.subr.bf16.mxu0 0
        %564 = vmatpush1.bf16.msra.mxu0 %v546
        %565 = vmatprep.subr.bf16.mxu0 0
        %566 = vmatpush1.bf16.msra.mxu0 %v547
        %567 = vmatprep.subr.bf16.mxu0 0
        %568 = vmatpush1.bf16.msra.mxu0 %v548
        %569 = vmatprep.subr.bf16.mxu0 0
        %570 = vmatpush1.bf16.msra.mxu0 %v549
        %571 = vmatprep.subr.bf16.mxu0 0
        %572 = vmatpush1.bf16.msra.mxu0 %v550
        %573 = vmatprep.subr.bf16.mxu0 0
        %574 = vmatpush1.bf16.msra.mxu0 %v551
        %575 = vmatprep.subr.bf16.mxu0 0
        %576 = vmatpush1.bf16.msra.mxu0 %v552
        %577 = vmatprep.subr.bf16.mxu0 0
        %578 = vmatpush1.bf16.msra.mxu0 0
        %579 = vmatprep.subr.bf16.mxu0 0
        %580 = vmatpush1.bf16.msra.mxu0 0
        %581 = vmatprep.subr.bf16.mxu0 0
        %582 = vmatpush1.bf16.msra.mxu0 0
        %583 = vmatprep.subr.bf16.mxu0 0
        %584 = vmatpush1.bf16.msra.mxu0 0
        %585 = vmatprep.subr.bf16.mxu0 0
        %586 = vmatpush1.bf16.msra.mxu0 0
        %587 = vmatprep.subr.bf16.mxu0 0
        %588 = vmatpush1.bf16.msra.mxu0 0
        %589 = vmatprep.subr.bf16.mxu0 0
        %590 = vmatpush1.bf16.msra.mxu0 0
        %591 = vmatprep.subr.bf16.mxu0 0
        %592 = vmatpush1.bf16.msra.mxu0 0
        %593 = vmatprep.mubr.bf16.mxu0 0
        %594 = vmatmul.mubr.bf16.gmra.mrb[0].mxu0 %v496
        %v595 = vpop.f32.mrb[0].mxu0
        %v596 = vadd.f32 0.0, %v595
        %v597 = vpop.f32.mrb[0].mxu0
        %v598 = vpop.f32.mrb[0].mxu0
        %v599 = vpop.f32.mrb[0].mxu0
        %600 = vdwg.mxu0
        %v601 = vadd.f32 %v495, %v596
        %602 = vst [vmem:[#allocation3] sm:$0xff] %v601
        // Predicated region
        $region65: #{tpu_custom_call.1} parent=43 // pred_check
          %p603 = pneg %p346
        $region66: #{tpu_custom_call.1} parent=43 // pred_check_branch
          %605 = sbr.rel (%p603) target = $region68
        $region67: #{tpu_custom_call.1} parent=43 // pred_region
          %v606 = vld [vmem:[#allocation3] sm:$0xff]
          %v607 = vld [vmem:[%s5] sm:$0x1]
          %v608 = vlaneseq
          %v609 = vshrl.u32 %v608, 7
          %v610 = vsub.s32 0, %v609
          %v611 = vrot.slane %v607, %v610
          %v612 = vadd.f32 %v606, %v611
          %v613 = vld [vmem:[#allocation2] sm:$0xff]
          %v614 = vadd.f32 %v613, %v612
          %v615 = vld [vmem:[%s5 + $0x3] sm:$0x1]
          %v616 = vld [vmem:[%s5 + $0x4] sm:$0x1]
          %617 = vadd.xlane.f32.xlu0 %v614
          %v618 = vpop.xlane.xlu0 %617
          %v619 = vmul.f32 %v614, %v614
          %620 = vadd.xlane.f32.xlu0 %v619
          %v621 = vpop.xlane.xlu0 %620
          %v622 = vmul.f32 %v618, 0.03125
          %v623 = vmul.f32 %v621, 0.03125
          %v624 = vmul.f32 %v622, %v622
          %v625 = vsub.f32 %v623, %v624
          %v626 = vmax.f32 %v625, 0.0
          %v627 = vsub.f32 %v614, %v622
          %v628 = vadd.f32 %v626, 1e-05
          %v629 = vrsqrt.pop %v628
          %v630 = vmul.f32 %v627, %v629
          %v631 = vlaneseq
          %v632 = vshrl.u32 %v631, 7
          %v633 = vsub.s32 0, %v632
          %v634 = vrot.slane %v615, %v633
          %v635 = vmul.f32 %v630, %v634
          %v636 = vlaneseq
          %v637 = vshrl.u32 %v636, 7
          %v638 = vsub.s32 0, %v637
          %v639 = vrot.slane %v616, %v638
          %v640 = vadd.f32 %v635, %v639
          %641 = vst [vmem:[%s344] sm:$0xff] %v640
        $region68: #{tpu_custom_call.1} parent=43 // pred_fallthru
          _
        %s642 = sand.u32 %s183, 1
        %s643 = scalar_lea.sflag [#allocation6], %s642
        %s644 = sand.u32 %s183, 1
        %s645 = smul.addr %s644, 8
        %s646 = scalar_lea.vmem [#allocation12], %s645
        // Predicated region
        $region69: #{tpu_custom_call.1} parent=43 // pred_check
          %p647 = pneg %p193
        $region70: #{tpu_custom_call.1} parent=43 // pred_check_branch
          %649 = sbr.rel (%p647) target = $region72
        $region71: #{tpu_custom_call.1} parent=43 // pred_region
          %s651 = ssub.s32 128, 128
          %652 = vsyncadd %s643, %s651
          %s653 = smul.addr %s31, 128
          %s654 = scalar_lea.hbm %s6, %s653
          %s656 = sshll.u32 %s646, 4
          %s657 = int_to_ptr.vmem [resolvable:$true] %s656
          %659 = dma.vmem_to_hbm [thread:$0]  %s657, 128, %s654, %s643
        $region72: #{tpu_custom_call.1} parent=43 // pred_fallthru
          _
      $region44: #{tpu_custom_call.1} parent=5 // pred_fallthru
        _
      %p660 = scmp.le.s32.totalorder 2, %s22
      // Predicated region
      $region73: #{tpu_custom_call.1} parent=5 // pred_check
        %p661 = pneg %p660
      $region74: #{tpu_custom_call.1} parent=5 // pred_check_branch
        %663 = sbr.rel (%p661) target = $region76
      $region75: #{tpu_custom_call.1} parent=5 // pred_region
        %s664 = ssub.s32 %s22, 2
        // Predicated region
        $region77: #{tpu_custom_call.1} parent=75 // pred_check
          %p665 = pneg %p199
        $region78: #{tpu_custom_call.1} parent=75 // pred_check_branch
          %667 = sbr.rel (%p665) target = $region80
        $region79: #{tpu_custom_call.1} parent=75 // pred_region
          %s668 = sand.u32 %s184, 1
          %s669 = scalar_lea.sflag [#allocation6], %s668
          %s670 = sand.u32 %s184, 1
          %s671 = smul.addr %s670, 8
          %s672 = scalar_lea.vmem [#allocation12], %s671
          %673 = dma.done %s669, 128
        $region80: #{tpu_custom_call.1} parent=75 // pred_fallthru
          _
      $region76: #{tpu_custom_call.1} parent=5 // pred_fallthru
        _
    $region6: #{tpu_custom_call.1} parent=1 // loop_footer
      %s26 = sadd.s32 1, %s22
    $region7: #{tpu_custom_call.1} parent=1 // loop_footer_branch
      %21 = sbr.rel target = $region3
    $region8: #{tpu_custom_call.1} parent=1 // loop_exit
      _
    %674 = vsyncpa [#allocation5], 1
    %s675 = scalar_lea.sflag [#allocation5], 1
    %676 = vsyncpa %s675, 1
    %677 = vsyncpa [#allocation8], 1
    %s678 = scalar_lea.sflag [#allocation8], 1
    %679 = vsyncpa %s678, 1
    %680 = vsyncpa [#allocation11], 1
    %681 = vsyncpa [#allocation6], 1
    %s682 = scalar_lea.sflag [#allocation6], 1
    %683 = vsyncpa %s682, 1

</llo_original>
